<compile_context>
chip_gen: v5e
topology: v5e:2x2
jax: 0.10.0
libtpu: 0.0.40
codegen_flags: <defaults>
</compile_context>

<pallas_src>
import jax
import jax.numpy as jnp
from jax.experimental import pallas as pl
from jax.experimental.pallas import tpu as pltpu


def actor_kernel(obs_ref, act_ref,
                 w1_ref, b1_ref, w2_ref, b2_ref, w3_ref, b3_ref,
                 logp_ref):
    # ---- MLP hot path on the MXU (bf16 operands, f32 accumulation) ----
    obs = obs_ref[...].astype(jnp.bfloat16)                                # [T, O]
    h1 = jnp.tanh(jnp.dot(obs, w1_ref[...],
                          preferred_element_type=jnp.float32) + b1_ref[...])
    h2 = jnp.tanh(jnp.dot(h1.astype(jnp.bfloat16), w2_ref[...],
                          preferred_element_type=jnp.float32) + b2_ref[...])
    logits = jnp.dot(h2.astype(jnp.bfloat16), w3_ref[...],
                     preferred_element_type=jnp.float32) + b3_ref[...]     # [T, A] f32

    # ---- Stable Categorical log-prob with the action gather fused in ----
    #   logp[b] = z[b, act[b]] - log(sum_a exp(z[b, a])),  z = logits - max(logits)
    m = jnp.max(logits, axis=-1, keepdims=True)                            # [T, 1]
    z = logits - m                                                         # [T, A]
    exp_z = jnp.exp(z)                                                     # [T, A]

    act = act_ref[...]                                                     # [T, 1] int32
    col = jax.lax.broadcasted_iota(jnp.int32, z.shape, 1)                  # [T, A]
    masked_z = jnp.where(col == act, z, 0.0)                               # [T, A]

    # Per-row reductions expressed as ones-vector matmuls so the results land
    # directly in lane-dense [1, T] row form (no masked stores, no relayout).
    ones_row = jnp.ones((1, z.shape[-1]), jnp.float32)                     # [1, A]
    dn = (((1,), (1,)), ((), ()))                                          # contract A with A
    sel_row = jax.lax.dot_general(ones_row, masked_z, dn,
                                  preferred_element_type=jnp.float32)      # [1, T]
    sumexp_row = jax.lax.dot_general(ones_row, exp_z, dn,
                                     preferred_element_type=jnp.float32)   # [1, T]

    logp_ref[...] = sel_row - jnp.log(sumexp_row)                          # [1, T]


def _choose_tile(batch: int, tile_b: int) -> int:
    """Lane-aligned batch tile; >= 2 tiles when possible (v7x megacore)."""
    if batch <= 128:
        return batch                      # single block equal to the full array dims
    half = ((pl.cdiv(batch, 2) + 127) // 128) * 128
    return max(128, min(int(tile_b), half))


def actor_forward(obs, act, params, *, tile_b=1024):
    """obs: [B, obs_dim] f32, act: [B] int -> log_prob [B] f32."""
    B, obs_dim = obs.shape
    w1, b1, w2, b2, w3, b3 = params
    hidden = w1.shape[1]
    act_dim = w3.shape[1]

    # Cast weights to bf16 once (outside the grid); biases stay f32 (added to
    # the f32 accumulators inside the kernel).
    w1 = w1.astype(jnp.bfloat16)
    w2 = w2.astype(jnp.bfloat16)
    w3 = w3.astype(jnp.bfloat16)
    b1 = b1.astype(jnp.float32)
    b2 = b2.astype(jnp.float32)
    b3 = b3.astype(jnp.float32)

    act2d = act.astype(jnp.int32).reshape(B, 1)

    tb = _choose_tile(B, tile_b)
    num_tiles = pl.cdiv(B, tb)

    # Batch tensors: streamed per grid step (auto double-buffered by Pallas).
    obs_spec = pl.BlockSpec((tb, obs_dim), lambda i: (i, 0))
    act_spec = pl.BlockSpec((tb, 1), lambda i: (i, 0))
    # Lane-dense output: one [1, tile_b] row per grid step.
    out_spec = pl.BlockSpec((1, tb), lambda i: (0, i))

    # Weights/biases: full-shape blocks, constant index_map -> DMA'd once,
    # resident in VMEM across all batch tiles.
    const = lambda i: (0, 0)
    w_specs = [
        pl.BlockSpec((obs_dim, hidden), const),   # w1
        pl.BlockSpec((1, hidden), const),         # b1
        pl.BlockSpec((hidden, hidden), const),    # w2
        pl.BlockSpec((1, hidden), const),         # b2
        pl.BlockSpec((hidden, act_dim), const),   # w3
        pl.BlockSpec((1, act_dim), const),        # b3
    ]

    out = pl.pallas_call(
        actor_kernel,
        out_shape=jax.ShapeDtypeStruct((1, B), jnp.float32),
        grid=(num_tiles,),
        in_specs=[obs_spec, act_spec] + w_specs,
        out_specs=out_spec,
        compiler_params=pltpu.CompilerParams(
            dimension_semantics=("parallel",),      # megacore sharding on v7x
            vmem_limit_bytes=32 * 1024 * 1024,      # portable; footprint is tiny anyway
        ),
    )(obs, act2d, w1, b1, w2, b2, w3, b3)
    return out[0]


def init_params(key, obs_dim, hidden, act_dim):
    k1, k2, k3 = jax.random.split(key, 3)
    scale = 0.1
    w1 = scale * jax.random.normal(k1, (obs_dim, hidden), jnp.float32)
    b1 = jnp.zeros((1, hidden), jnp.float32)
    w2 = scale * jax.random.normal(k2, (hidden, hidden), jnp.float32)
    b2 = jnp.zeros((1, hidden), jnp.float32)
    w3 = scale * jax.random.normal(k3, (hidden, act_dim), jnp.float32)
    b3 = jnp.zeros((1, act_dim), jnp.float32)
    return (w1, b1, w2, b2, w3, b3)


def actor_forward_ref(obs, act, params):
    """Pure-JAX f32 reference for correctness checking."""
    w1, b1, w2, b2, w3, b3 = params
    h1 = jnp.tanh(obs @ w1 + b1)
    h2 = jnp.tanh(h1 @ w2 + b2)
    logits = h2 @ w3 + b3
    logp = jax.nn.log_softmax(logits, axis=-1)
    return jnp.take_along_axis(logp, act[:, None].astype(jnp.int32), axis=-1)[:, 0]


if __name__ == "__main__":
    OBS_DIM, HIDDEN, ACT_DIM = 32, 64, 8

    key = jax.random.PRNGKey(0)
    k_obs, k_act, k_par = jax.random.split(key, 3)
    params = init_params(k_par, OBS_DIM, HIDDEN, ACT_DIM)

    # Small single-tile batch.
    B = 8
    obs = jax.random.normal(k_obs, (B, OBS_DIM), jnp.float32)
    act = jax.random.randint(k_act, (B,), 0, ACT_DIM, jnp.int32)
    log_prob = actor_forward(obs, act, params)
    jax.block_until_ready(log_prob)
    ref = actor_forward_ref(obs, act, params)
    assert log_prob.shape == (B,)
    assert jnp.allclose(log_prob, ref, atol=2e-2, rtol=2e-2), (log_prob, ref)

    # Multi-tile path with a ragged final block (exercises the grid, the
    # VMEM-resident weights, and the no-host-padding tail masking).
    B2 = 300
    k_obs2, k_act2 = jax.random.split(jax.random.PRNGKey(1))
    obs2 = jax.random.normal(k_obs2, (B2, OBS_DIM), jnp.float32)
    act2 = jax.random.randint(k_act2, (B2,), 0, ACT_DIM, jnp.int32)
    lp_default = actor_forward(obs2, act2, params)              # tile=256, grid=2
    lp_small = actor_forward(obs2, act2, params, tile_b=128)    # tile=128, grid=3 (ragged tail)
    jax.block_until_ready((lp_default, lp_small))
    ref2 = actor_forward_ref(obs2, act2, params)
    assert lp_default.shape == (B2,) and lp_small.shape == (B2,)
    assert jnp.allclose(lp_default, ref2, atol=2e-2, rtol=2e-2), (lp_default, ref2)
    assert jnp.allclose(lp_small, ref2, atol=2e-2, rtol=2e-2), (lp_small, ref2)

    print("KERNEL_OK")
</pallas_src>

<mosaic_0001>
module attributes {stable_mosaic.version = 11 : i64} {
  func.func @actor_kernel(%arg0: i32, %arg1: memref<8x32xf32, #tpu.memory_space<vmem>>, %arg2: memref<8x1xi32, #tpu.memory_space<vmem>>, %arg3: memref<32x64xbf16, #tpu.memory_space<vmem>>, %arg4: memref<1x64xf32, #tpu.memory_space<vmem>>, %arg5: memref<64x64xbf16, #tpu.memory_space<vmem>>, %arg6: memref<1x64xf32, #tpu.memory_space<vmem>>, %arg7: memref<64x8xbf16, #tpu.memory_space<vmem>>, %arg8: memref<1x8xf32, #tpu.memory_space<vmem>>, %arg9: memref<1x8xf32, #tpu.memory_space<vmem>>) attributes {dimension_semantics = [#tpu.dimension_semantics<parallel>], iteration_bounds = array<i64: 1>, scalar_prefetch = 0 : i64, scratch_operands = 0 : i64, tpu.core_type = #tpu.core_type<tc>, window_params = [{transform_indices = @transform_0, window_bounds = array<i64: 8, 32>}, {transform_indices = @transform_1, window_bounds = array<i64: 8, 1>}, {pipeline_mode = #tpu.pipeline_mode<synchronous>, transform_indices = @transform_2, window_bounds = array<i64: 32, 64>}, {pipeline_mode = #tpu.pipeline_mode<synchronous>, transform_indices = @transform_3, window_bounds = array<i64: 1, 64>}, {pipeline_mode = #tpu.pipeline_mode<synchronous>, transform_indices = @transform_4, window_bounds = array<i64: 64, 64>}, {pipeline_mode = #tpu.pipeline_mode<synchronous>, transform_indices = @transform_5, window_bounds = array<i64: 1, 64>}, {pipeline_mode = #tpu.pipeline_mode<synchronous>, transform_indices = @transform_6, window_bounds = array<i64: 64, 8>}, {pipeline_mode = #tpu.pipeline_mode<synchronous>, transform_indices = @transform_7, window_bounds = array<i64: 1, 8>}, {transform_indices = @transform_8, window_bounds = array<i64: 1, 8>}]} {
    %c0 = arith.constant 0 : index
    %c0_0 = arith.constant 0 : index
    %0 = vector.load %arg1[%c0, %c0_0] : memref<8x32xf32, #tpu.memory_space<vmem>>, vector<8x32xf32>
    %1 = arith.truncf %0 : vector<8x32xf32> to vector<8x32xbf16>
    %c0_1 = arith.constant 0 : index
    %c0_2 = arith.constant 0 : index
    %2 = vector.load %arg3[%c0_1, %c0_2] : memref<32x64xbf16, #tpu.memory_space<vmem>>, vector<32x64xbf16>
    %cst = arith.constant dense<0.000000e+00> : vector<8x64xf32>
    %3 = tpu.matmul %1, %2, %cst {dimension_numbers = #tpu.dot_dimension_numbers<[1], [0], [0], [1], [0, 0, 1, 1], [], []>} : vector<8x32xbf16>, vector<32x64xbf16>, vector<8x64xf32> -> vector<8x64xf32>
    %c0_3 = arith.constant 0 : index
    %c0_4 = arith.constant 0 : index
    %4 = vector.load %arg4[%c0_3, %c0_4] : memref<1x64xf32, #tpu.memory_space<vmem>>, vector<1x64xf32>
    %5 = vector.broadcast %4 : vector<1x64xf32> to vector<8x64xf32>
    %6 = arith.addf %3, %5 : vector<8x64xf32>
    %7 = math.tanh %6 : vector<8x64xf32>
    %8 = arith.truncf %7 : vector<8x64xf32> to vector<8x64xbf16>
    %c0_5 = arith.constant 0 : index
    %c0_6 = arith.constant 0 : index
    %9 = vector.load %arg5[%c0_5, %c0_6] : memref<64x64xbf16, #tpu.memory_space<vmem>>, vector<64x64xbf16>
    %cst_7 = arith.constant dense<0.000000e+00> : vector<8x64xf32>
    %10 = tpu.matmul %8, %9, %cst_7 {dimension_numbers = #tpu.dot_dimension_numbers<[1], [0], [0], [1], [0, 0, 1, 1], [], []>} : vector<8x64xbf16>, vector<64x64xbf16>, vector<8x64xf32> -> vector<8x64xf32>
    %c0_8 = arith.constant 0 : index
    %c0_9 = arith.constant 0 : index
    %11 = vector.load %arg6[%c0_8, %c0_9] : memref<1x64xf32, #tpu.memory_space<vmem>>, vector<1x64xf32>
    %12 = vector.broadcast %11 : vector<1x64xf32> to vector<8x64xf32>
    %13 = arith.addf %10, %12 : vector<8x64xf32>
    %14 = math.tanh %13 : vector<8x64xf32>
    %15 = arith.truncf %14 : vector<8x64xf32> to vector<8x64xbf16>
    %c0_10 = arith.constant 0 : index
    %c0_11 = arith.constant 0 : index
    %16 = vector.load %arg7[%c0_10, %c0_11] : memref<64x8xbf16, #tpu.memory_space<vmem>>, vector<64x8xbf16>
    %cst_12 = arith.constant dense<0.000000e+00> : vector<8x8xf32>
    %17 = tpu.matmul %15, %16, %cst_12 {dimension_numbers = #tpu.dot_dimension_numbers<[1], [0], [0], [1], [0, 0, 1, 1], [], []>} : vector<8x64xbf16>, vector<64x8xbf16>, vector<8x8xf32> -> vector<8x8xf32>
    %c0_13 = arith.constant 0 : index
    %c0_14 = arith.constant 0 : index
    %18 = vector.load %arg8[%c0_13, %c0_14] : memref<1x8xf32, #tpu.memory_space<vmem>>, vector<1x8xf32>
    %19 = vector.broadcast %18 : vector<1x8xf32> to vector<8x8xf32>
    %20 = arith.addf %17, %19 : vector<8x8xf32>
    %cst_15 = arith.constant dense<0xFF800000> : vector<8xf32>
    %21 = vector.multi_reduction <maximumf>, %20, %cst_15 [1] : vector<8x8xf32> to vector<8xf32>
    %22 = vector.shape_cast %21 : vector<8xf32> to vector<8x1xf32>
    %23 = vector.broadcast %22 : vector<8x1xf32> to vector<8x8xf32>
    %24 = arith.subf %20, %23 : vector<8x8xf32>
    %25 = math.exp %24 : vector<8x8xf32>
    %c0_16 = arith.constant 0 : index
    %c0_17 = arith.constant 0 : index
    %26 = vector.load %arg2[%c0_16, %c0_17] : memref<8x1xi32, #tpu.memory_space<vmem>>, vector<8x1xi32>
    %27 = tpu.iota {dimensions = array<i32: 1>} : vector<8x8xi32>
    %28 = vector.broadcast %26 : vector<8x1xi32> to vector<8x8xi32>
    %29 = arith.cmpi eq, %27, %28 : vector<8x8xi32>
    %cst_18 = arith.constant 0.000000e+00 : f32
    %30 = vector.broadcast %cst_18 : f32 to vector<8x8xf32>
    %31 = arith.select %29, %24, %30 : vector<8x8xi1>, vector<8x8xf32>
    %cst_19 = arith.constant 1.000000e+00 : f32
    %32 = vector.broadcast %cst_19 : f32 to vector<1x8xf32>
    %cst_20 = arith.constant dense<0.000000e+00> : vector<1x8xf32>
    %33 = tpu.matmul %32, %31, %cst_20 {dimension_numbers = #tpu.dot_dimension_numbers<[1], [1], [0], [0], [0, 0, 1, 0], [], []>} : vector<1x8xf32>, vector<8x8xf32>, vector<1x8xf32> -> vector<1x8xf32>
    %cst_21 = arith.constant dense<0.000000e+00> : vector<1x8xf32>
    %34 = tpu.matmul %32, %25, %cst_21 {dimension_numbers = #tpu.dot_dimension_numbers<[1], [1], [0], [0], [0, 0, 1, 0], [], []>} : vector<1x8xf32>, vector<8x8xf32>, vector<1x8xf32> -> vector<1x8xf32>
    %35 = math.log %34 : vector<1x8xf32>
    %36 = arith.subf %33, %35 : vector<1x8xf32>
    %c0_22 = arith.constant 0 : index
    %c0_23 = arith.constant 0 : index
    %37 = vector.load %arg9[%c0_22, %c0_23] : memref<1x8xf32, #tpu.memory_space<vmem>>, vector<1x8xf32>
    tpu.vector_store %arg9[%c0_22, %c0_23], %36 {strides = array<i32>} : memref<1x8xf32, #tpu.memory_space<vmem>>, vector<1x8xf32>,
    return
  }
  func.func @transform_0(%arg0: i32) -> (i32, i32) {
    %c0_i32 = arith.constant 0 : i32
    %c0_i32_0 = arith.constant 0 : i32
    return %arg0, %c0_i32 : i32, i32
  }
  func.func @transform_1(%arg0: i32) -> (i32, i32) {
    %c0_i32 = arith.constant 0 : i32
    %c0_i32_0 = arith.constant 0 : i32
    return %arg0, %c0_i32 : i32, i32
  }
  func.func @transform_2(%arg0: i32) -> (i32, i32) {
    %c0_i32 = arith.constant 0 : i32
    %c0_i32_0 = arith.constant 0 : i32
    %c0_i32_1 = arith.constant 0 : i32
    return %c0_i32, %c0_i32_0 : i32, i32
  }
  func.func @transform_3(%arg0: i32) -> (i32, i32) {
    %c0_i32 = arith.constant 0 : i32
    %c0_i32_0 = arith.constant 0 : i32
    %c0_i32_1 = arith.constant 0 : i32
    return %c0_i32, %c0_i32_0 : i32, i32
  }
  func.func @transform_4(%arg0: i32) -> (i32, i32) {
    %c0_i32 = arith.constant 0 : i32
    %c0_i32_0 = arith.constant 0 : i32
    %c0_i32_1 = arith.constant 0 : i32
    return %c0_i32, %c0_i32_0 : i32, i32
  }
  func.func @transform_5(%arg0: i32) -> (i32, i32) {
    %c0_i32 = arith.constant 0 : i32
    %c0_i32_0 = arith.constant 0 : i32
    %c0_i32_1 = arith.constant 0 : i32
    return %c0_i32, %c0_i32_0 : i32, i32
  }
  func.func @transform_6(%arg0: i32) -> (i32, i32) {
    %c0_i32 = arith.constant 0 : i32
    %c0_i32_0 = arith.constant 0 : i32
    %c0_i32_1 = arith.constant 0 : i32
    return %c0_i32, %c0_i32_0 : i32, i32
  }
  func.func @transform_7(%arg0: i32) -> (i32, i32) {
    %c0_i32 = arith.constant 0 : i32
    %c0_i32_0 = arith.constant 0 : i32
    %c0_i32_1 = arith.constant 0 : i32
    return %c0_i32, %c0_i32_0 : i32, i32
  }
  func.func @transform_8(%arg0: i32) -> (i32, i32) {
    %c0_i32 = arith.constant 0 : i32
    %c0_i32_0 = arith.constant 0 : i32
    return %c0_i32, %arg0 : i32, i32
  }
}

</mosaic_0001>

<llo_original>
// kernel: tpu_custom_call.1
$region0: #{tpu_custom_call.1}
  #allocation0 [shape = 'u32[]', space=smem, size = 0x4, offset = 0x4, fixed_abs, tag = 'smem constant byte address 0x4 - core index']
  #allocation1 [shape = 'u32[72,128]{1,0:T(1,128)}', space=vmem, size = 0x9000, scoped, tag = 'internal scratch']
  %s0 = inlined_call_operand.vmem [shape: f32[8,32], index: 0, kind: input, shape index: {}]
  %s1 = inlined_call_operand.vmem [shape: s32[8,1], index: 1, kind: input, shape index: {}]
  %s2 = inlined_call_operand.hbm [shape: bf16[32,64], index: 2, kind: input, shape index: {}]
  %s3 = inlined_call_operand.vmem [shape: f32[1,64], index: 3, kind: input, shape index: {}]
  %s4 = inlined_call_operand.vmem [shape: bf16[64,64], index: 4, kind: input, shape index: {}]
  %s5 = inlined_call_operand.vmem [shape: f32[1,64], index: 5, kind: input, shape index: {}]
  %s6 = inlined_call_operand.vmem [shape: bf16[64,8], index: 6, kind: input, shape index: {}]
  %s7 = inlined_call_operand.vmem [shape: f32[1,8], index: 7, kind: input, shape index: {}]
  %s8 = inlined_call_operand.hbm [shape: f32[1,8], index: 8, kind: output, shape index: {}]
  %s9 = sld [smem:[#allocation0]]
  $region46: #{tpu_custom_call.1} parent=0
    _
  %s11 = ssub.s32 1, %s9
  %s12 = scalar_select 0, %s11, %s9
  $region1: #{tpu_custom_call.1} parent=0
    #allocation2 [shape = 'u8[8192]{0}', space=vmem, size = 0x2000, scoped, tag = 'input window, operand 2, single buffered']
    #allocation3 [shape = 's32[1]{0}', space=sflag, size = 0x4, scoped, tag = 'scoped memory for tpu_custom_call.1']
    #allocation4 [shape = 's32[1]{0}', space=sflag, size = 0x4, scoped, tag = 'scoped memory for tpu_custom_call.1']
    #allocation5 [shape = 'u8[512]{0}', space=vmem, size = 0x400, scoped, tag = 'output window, operand 0, single buffered']
    %13 = vsyncpa [#allocation3], 0
    %14 = vsyncpa [#allocation4], 0
    // Predicated region
    $region2: #{tpu_custom_call.1} parent=1 // pred_check
      _
    $region3: #{tpu_custom_call.1} parent=1 // pred_check_branch
      %16 = sbr.rel (0) target = $region5
    $region4: #{tpu_custom_call.1} parent=1 // pred_region
      _
    $region5: #{tpu_custom_call.1} parent=1 // pred_fallthru
      _
    // Predicated region
    $region6: #{tpu_custom_call.1} parent=1 // pred_check
      _
    $region7: #{tpu_custom_call.1} parent=1 // pred_check_branch
      %18 = sbr.rel (0) target = $region9
    $region8: #{tpu_custom_call.1} parent=1 // pred_region
      _
    $region9: #{tpu_custom_call.1} parent=1 // pred_fallthru
      _
    // Predicated region
    $region10: #{tpu_custom_call.1} parent=1 // pred_check
      _
    $region11: #{tpu_custom_call.1} parent=1 // pred_check_branch
      %20 = sbr.rel (0) target = $region13
    $region12: #{tpu_custom_call.1} parent=1 // pred_region
      %22 = vsyncadd [#allocation3], 0
      %s23 = sshll.u32 %s2, 4
      %s24 = int_to_ptr.hbm [resolvable:$true] %s23
      %s25 = sshll.u32 [#allocation2], 4
      %s26 = int_to_ptr.vmem [resolvable:$true] %s25
      %31 = dma.hbm_to_vmem [thread:$0]  %s24, 256, %s26, [#allocation3], 64, 64, 4
    $region13: #{tpu_custom_call.1} parent=1 // pred_fallthru
      _
    // Predicated region
    $region14: #{tpu_custom_call.1} parent=1 // pred_check
      _
    $region15: #{tpu_custom_call.1} parent=1 // pred_check_branch
      %33 = sbr.rel (0) target = $region17
    $region16: #{tpu_custom_call.1} parent=1 // pred_region
      _
    $region17: #{tpu_custom_call.1} parent=1 // pred_fallthru
      _
    // Predicated region
    $region18: #{tpu_custom_call.1} parent=1 // pred_check
      _
    $region19: #{tpu_custom_call.1} parent=1 // pred_check_branch
      %35 = sbr.rel (0) target = $region21
    $region20: #{tpu_custom_call.1} parent=1 // pred_region
      _
    $region21: #{tpu_custom_call.1} parent=1 // pred_fallthru
      _
    // Predicated region
    $region22: #{tpu_custom_call.1} parent=1 // pred_check
      _
    $region23: #{tpu_custom_call.1} parent=1 // pred_check_branch
      %37 = sbr.rel (0) target = $region25
    $region24: #{tpu_custom_call.1} parent=1 // pred_region
      _
    $region25: #{tpu_custom_call.1} parent=1 // pred_fallthru
      _
    // Predicated region
    $region26: #{tpu_custom_call.1} parent=1 // pred_check
      _
    $region27: #{tpu_custom_call.1} parent=1 // pred_check_branch
      %39 = sbr.rel (0) target = $region29
    $region28: #{tpu_custom_call.1} parent=1 // pred_region
      _
    $region29: #{tpu_custom_call.1} parent=1 // pred_fallthru
      _
    // Predicated region
    $region30: #{tpu_custom_call.1} parent=1 // pred_check
      _
    $region31: #{tpu_custom_call.1} parent=1 // pred_check_branch
      %41 = sbr.rel (0) target = $region33
    $region32: #{tpu_custom_call.1} parent=1 // pred_region
      _
    $region33: #{tpu_custom_call.1} parent=1 // pred_fallthru
      _
    // Predicated region
    $region34: #{tpu_custom_call.1} parent=1 // pred_check
      _
    $region35: #{tpu_custom_call.1} parent=1 // pred_check_branch
      %43 = sbr.rel (0) target = $region37
    $region36: #{tpu_custom_call.1} parent=1 // pred_region
      %45 = dma.done [#allocation3], 256
    $region37: #{tpu_custom_call.1} parent=1 // pred_fallthru
      _
    %v47 = vld [vmem:[%s0] sm:$0xff]
    %v48 = vpack.c.bf16 %v47, %v47
    %v49 = vld [vmem:[#allocation2] sm:$0xf]
    %v50 = vld [vmem:[#allocation2 + $0x4] sm:$0xf]
    %v51 = vld [vmem:[#allocation2 + $0x8] sm:$0xf]
    %v52 = vld [vmem:[#allocation2 + $0xc] sm:$0xf]
    %v53 = vld [vmem:[%s3] sm:$0x1]
    %v55 = vperm.slane %v53, 0
    %v61 = vunpack.c.l.b16 %v49
    %v62 = vunpack.c.l.b16 %v50
    %v63 = vunpack.c.l.b16 %v51
    %v64 = vunpack.c.l.b16 %v52
    %v65 = vpack.c.b16 %v62, %v61
    %v66 = vpack.c.b16 %v64, %v63
    %vm69 = vcmask 261120
    %v71 = vsel %vm69, %v48, 0
    %73 = vmatpush.bf16.msra.mxu0 0
    %74 = vmatpush.bf16.msra.mxu0 0
    %75 = vmatpush.bf16.msra.mxu0 0
    %76 = vmatpush.bf16.msra.mxu0 0
    %77 = vmatpush.bf16.msra.mxu0 0
    %78 = vmatpush.bf16.msra.mxu0 0
    %79 = vmatpush.bf16.msra.mxu0 %v66
    %80 = vmatpush.bf16.msra.mxu0 %v65
    %81 = vmatmul.bf16.gmra.mxu0 %v71
    %v82 = vpop.f32.mrf.mxu0
    %v83 = vadd.f32 %v55, %v82
    %v84 = vpop.f32.mrf.mxu0
    %85 = vdwg.mxu0
    %v86 = vtanh.pop %v83
    %v87 = vpack.c.bf16 %v86, %v86
    %v88 = vld [vmem:[%s4] sm:$0xf]
    %v89 = vld [vmem:[%s4 + $0x4] sm:$0xf]
    %v90 = vld [vmem:[%s4 + $0x8] sm:$0xf]
    %v91 = vld [vmem:[%s4 + $0xc] sm:$0xf]
    %v92 = vld [vmem:[%s4 + $0x10] sm:$0xf]
    %v93 = vld [vmem:[%s4 + $0x14] sm:$0xf]
    %v94 = vld [vmem:[%s4 + $0x18] sm:$0xf]
    %v95 = vld [vmem:[%s4 + $0x1c] sm:$0xf]
    %v96 = vld [vmem:[%s5] sm:$0x1]
    %v98 = vperm.slane %v96, 0
    %v108 = vunpack.c.l.b16 %v88
    %v109 = vunpack.c.l.b16 %v89
    %v110 = vunpack.c.l.b16 %v90
    %v111 = vunpack.c.l.b16 %v91
    %v112 = vunpack.c.l.b16 %v92
    %v113 = vunpack.c.l.b16 %v93
    %v114 = vunpack.c.l.b16 %v94
    %v115 = vunpack.c.l.b16 %v95
    %v116 = vpack.c.b16 %v109, %v108
    %v117 = vpack.c.b16 %v111, %v110
    %v118 = vpack.c.b16 %v113, %v112
    %v119 = vpack.c.b16 %v115, %v114
    %vm124 = vcmask 523264
    %v126 = vsel %vm124, %v87, 0
    %128 = vmatpush.bf16.msra.mxu0 0
    %129 = vmatpush.bf16.msra.mxu0 0
    %130 = vmatpush.bf16.msra.mxu0 0
    %131 = vmatpush.bf16.msra.mxu0 0
    %132 = vmatpush.bf16.msra.mxu0 %v119
    %133 = vmatpush.bf16.msra.mxu0 %v118
    %134 = vmatpush.bf16.msra.mxu0 %v117
    %135 = vmatpush.bf16.msra.mxu0 %v116
    %136 = vmatmul.bf16.gmra.mxu0 %v126
    %v137 = vpop.f32.mrf.mxu0
    %v138 = vadd.f32 %v98, %v137
    %v139 = vpop.f32.mrf.mxu0
    %140 = vdwg.mxu0
    %v141 = vtanh.pop %v138
    %v142 = vpack.c.bf16 %v141, %v141
    %v143 = vld [vmem:[%s6] sm:$0xf]
    %v144 = vld [vmem:[%s6 + $0x4] sm:$0xf]
    %v145 = vld [vmem:[%s6 + $0x8] sm:$0xf]
    %v146 = vld [vmem:[%s6 + $0xc] sm:$0xf]
    %v147 = vld [vmem:[%s6 + $0x10] sm:$0xf]
    %v148 = vld [vmem:[%s6 + $0x14] sm:$0xf]
    %v149 = vld [vmem:[%s6 + $0x18] sm:$0xf]
    %v150 = vld [vmem:[%s6 + $0x1c] sm:$0xf]
    %v151 = vld [vmem:[%s7] sm:$0x1]
    %v153 = vperm.slane %v151, 0
    %v163 = vunpack.c.l.b16 %v143
    %v164 = vunpack.c.l.b16 %v144
    %v165 = vunpack.c.l.b16 %v145
    %v166 = vunpack.c.l.b16 %v146
    %v167 = vunpack.c.l.b16 %v147
    %v168 = vunpack.c.l.b16 %v148
    %v169 = vunpack.c.l.b16 %v149
    %v170 = vunpack.c.l.b16 %v150
    %v171 = vpack.c.b16 %v164, %v163
    %v172 = vpack.c.b16 %v166, %v165
    %v173 = vpack.c.b16 %v168, %v167
    %v174 = vpack.c.b16 %v170, %v169
    %v180 = vsel %vm124, %v142, 0
    %182 = vmatpush.bf16.msra.mxu0 0
    %183 = vmatpush.bf16.msra.mxu0 0
    %184 = vmatpush.bf16.msra.mxu0 0
    %185 = vmatpush.bf16.msra.mxu0 0
    %186 = vmatpush.bf16.msra.mxu0 %v174
    %187 = vmatpush.bf16.msra.mxu0 %v173
    %188 = vmatpush.bf16.msra.mxu0 %v172
    %189 = vmatpush.bf16.msra.mxu0 %v171
    %190 = vmatmul.bf16.gmra.mxu0 %v180
    %v191 = vpop.f32.mrf.mxu0
    %v192 = vadd.f32 %v153, %v191
    %v193 = vpop.f32.mrf.mxu0
    %194 = vdwg.mxu0
    %vm195 = vcmask 64512
    %v196 = vsel %vm195, %v192, -inf
    %197 = vmax.xlane.f32.xlu0 %v196
    %v198 = vpop.xlane.xlu0 %197
    %v199 = vsub.f32 %v192, %v198
    %v200 = vmul.f32 %v199, 1.442695
    %v201 = vpow.pop %v200
    %v202 = vld [vmem:[%s1] sm:$0xff]
    %v203 = vlaneseq
    %v204 = vand.u32 %v203, 127
    %205 = vset.pattern.permute.xlu0 0
    %206 = vperm.xlu0 %205, %v202
    %v207 = vpop.permute.xlu0 %206
    %vm208 = vcmp.eq.s32.totalorder %v204, %v207
    %v209 = vsel %vm208, %v199, 0.0
    %v211 = vsel %vm195, 1.0, 0
    %v214 = vsel %vm195, %v209, 0
    %216 = vmatpush.xpose.msra.mxu0 0.0
    %217 = vmatpush.xpose.msra.mxu0 0.0
    %218 = vmatpush.xpose.msra.mxu0 0.0
    %219 = vmatpush.xpose.msra.mxu0 0.0
    %220 = vmatpush.xpose.msra.mxu0 0.0
    %221 = vmatpush.xpose.msra.mxu0 0.0
    %222 = vmatpush.xpose.msra.mxu0 0.0
    %223 = vmatpush.xpose.msra.mxu0 0.0
    %224 = vmatpush.xpose.msra.mxu0 0.0
    %225 = vmatpush.xpose.msra.mxu0 0.0
    %226 = vmatpush.xpose.msra.mxu0 0.0
    %227 = vmatpush.xpose.msra.mxu0 0.0
    %228 = vmatpush.xpose.msra.mxu0 0.0
    %229 = vmatpush.xpose.msra.mxu0 0.0
    %230 = vmatpush.xpose.msra.mxu0 0.0
    %231 = vmatpush.xpose.msra.mxu0 %v214
    %232 = vmatmul.f32.gmra.mxu0 %v211
    %v233 = vpop.f32.mrf.mxu0
    %v234 = vadd.f32 0.0, %v233
    %235 = vdwg.mxu0
    %v237 = vsel %vm195, %v201, 0
    %239 = vmatpush.xpose.msra.mxu0 0.0
    %240 = vmatpush.xpose.msra.mxu0 0.0
    %241 = vmatpush.xpose.msra.mxu0 0.0
    %242 = vmatpush.xpose.msra.mxu0 0.0
    %243 = vmatpush.xpose.msra.mxu0 0.0
    %244 = vmatpush.xpose.msra.mxu0 0.0
    %245 = vmatpush.xpose.msra.mxu0 0.0
    %246 = vmatpush.xpose.msra.mxu0 0.0
    %247 = vmatpush.xpose.msra.mxu0 0.0
    %248 = vmatpush.xpose.msra.mxu0 0.0
    %249 = vmatpush.xpose.msra.mxu0 0.0
    %250 = vmatpush.xpose.msra.mxu0 0.0
    %251 = vmatpush.xpose.msra.mxu0 0.0
    %252 = vmatpush.xpose.msra.mxu0 0.0
    %253 = vmatpush.xpose.msra.mxu0 0.0
    %254 = vmatpush.xpose.msra.mxu0 %v237
    %255 = vmatmul.f32.gmra.mxu0 %v211
    %v256 = vpop.f32.mrf.mxu0
    %v257 = vadd.f32 0.0, %v256
    %258 = vdwg.mxu0
    %v259 = vlog2.pop %v257
    %v260 = vmul.f32 %v259, 0.6931472
    %v261 = vsub.f32 %v234, %v260
    %vm262 = vcmask 57344
    %263 = vst.msk [vmem:[#allocation5] sm:$0x1] %vm262, %v261
    // Predicated region
    $region38: #{tpu_custom_call.1} parent=1 // pred_check
      _
    $region39: #{tpu_custom_call.1} parent=1 // pred_check_branch
      %265 = sbr.rel (0) target = $region41
    $region40: #{tpu_custom_call.1} parent=1 // pred_region
      %267 = vsyncadd [#allocation4], 0
      %s269 = sshll.u32 [#allocation5], 4
      %s270 = int_to_ptr.vmem [resolvable:$true] %s269
      %s271 = sshll.u32 %s8, 4
      %s272 = int_to_ptr.hbm [resolvable:$true] %s271
      %274 = dma.vmem_to_hbm [thread:$0]  %s270, 16, %s272, [#allocation4]
    $region41: #{tpu_custom_call.1} parent=1 // pred_fallthru
      _
    // Predicated region
    $region42: #{tpu_custom_call.1} parent=1 // pred_check
      _
    $region43: #{tpu_custom_call.1} parent=1 // pred_check_branch
      %276 = sbr.rel (0) target = $region45
    $region44: #{tpu_custom_call.1} parent=1 // pred_region
      %278 = dma.done [#allocation4], 16
    $region45: #{tpu_custom_call.1} parent=1 // pred_fallthru
      _
    %279 = vsyncpa [#allocation3], 1
    %280 = vsyncpa [#allocation4], 1

</llo_original>
